<compile_context>
chip_gen: v6e
topology: v6e:2x2x1
jax: 0.10.0
libtpu: 0.0.40
codegen_flags: <defaults>
</compile_context>

<pallas_src>
import jax
import jax.numpy as jnp
import numpy as np
from jax.experimental import pallas as pl
from jax.experimental.pallas import tpu as pltpu


def _sbd_kernel(grid_ref, z_ref, out_ref):
    # grid_ref: (Z+2, HW)      channels 0,1 hold x/y grids, channels 2.. are 0
    # z_ref:    (TB, Z+2, 1)   channels 0,1 are 0, channels 2.. hold the latent
    # out_ref:  (TB, Z+2, HW)  output tile (lane-dense last axis)
    tb, zp2, hw = out_ref.shape

    ch = jax.lax.broadcasted_iota(jnp.int32, (tb, zp2, hw), dimension=1)
    g = jnp.broadcast_to(grid_ref[...][None, :, :], (tb, zp2, hw))
    zb = jnp.broadcast_to(z_ref[...], (tb, zp2, hw))   # stride-0 lane broadcast

    # channels < 2 -> coordinate grids, channels >= 2 -> broadcast latent.
    # One full unmasked tile store.
    out_ref[...] = jnp.where(ch < 2, g, zb)


def spatial_broadcast_decoder(z, im_size=16, max_tb=512):
    """z: (B, Z) -> (B, Z+2, im_size, im_size) float32 (matches PyTorch module)."""
    B, Z = z.shape
    H = W = im_size
    HW = H * W
    C = Z + 2

    # Coordinate grids (match torch.meshgrid default indexing='ij'),
    # packed into the first two channels of a (Z+2, HW) constant.
    lin = jnp.linspace(-1.0, 1.0, im_size, dtype=jnp.float32)
    x_grid, y_grid = jnp.meshgrid(lin, lin, indexing="ij")   # (H, W) each
    grid_full = jnp.concatenate(
        [x_grid.reshape(1, HW), y_grid.reshape(1, HW),
         jnp.zeros((Z, HW), jnp.float32)], axis=0)           # (Z+2, HW)

    # Batch blocking: many rows per grid step to amortize per-step overhead.
    TB = int(min(B, max_tb))
    nb = pl.cdiv(B, TB)
    B_pad = nb * TB

    z32 = z.astype(jnp.float32)
    # Shift latent to channels 2.. and pad batch up to a multiple of TB.
    zc = jnp.pad(z32, ((0, B_pad - B), (2, 0)))              # (B_pad, Z+2)
    zc = zc[:, :, None]                                      # (B_pad, Z+2, 1)

    out_flat = pl.pallas_call(
        _sbd_kernel,
        out_shape=jax.ShapeDtypeStruct((B_pad, C, HW), jnp.float32),
        grid_spec=pltpu.PrefetchScalarGridSpec(
            num_scalar_prefetch=0,
            grid=(nb,),
            in_specs=[
                pl.BlockSpec((C, HW), lambda b: (0, 0)),      # shared constant
                pl.BlockSpec((TB, C, 1), lambda b: (b, 0, 0)),  # latent rows
            ],
            out_specs=pl.BlockSpec((TB, C, HW), lambda b: (b, 0, 0)),
        ),
        compiler_params=pltpu.CompilerParams(
            dimension_semantics=("parallel",),
            vmem_limit_bytes=32 * 1024 * 1024,
        ),
    )(grid_full, zc)

    if B_pad != B:
        out_flat = out_flat[:B]
    return out_flat.reshape(B, C, H, W)


def _reference(z, im_size=16):
    """Pure-JAX reference mirroring the PyTorch forward."""
    B, Z = z.shape
    lin = jnp.linspace(-1.0, 1.0, im_size, dtype=jnp.float32)
    x_grid, y_grid = jnp.meshgrid(lin, lin, indexing="ij")
    xg = jnp.broadcast_to(x_grid[None, None], (B, 1, im_size, im_size))
    yg = jnp.broadcast_to(y_grid[None, None], (B, 1, im_size, im_size))
    zb = jnp.broadcast_to(z.astype(jnp.float32)[:, :, None, None],
                          (B, Z, im_size, im_size))
    return jnp.concatenate([xg, yg, zb], axis=1)


if __name__ == "__main__":
    key = jax.random.PRNGKey(0)

    # Small shapes consistent with the module.
    B, Z, IM = 2, 6, 16
    z = jax.random.normal(key, (B, Z), dtype=jnp.float32)

    out = spatial_broadcast_decoder(z, im_size=IM)
    out = jax.block_until_ready(out)
    ref = _reference(z, im_size=IM)
    np.testing.assert_allclose(np.asarray(out), np.asarray(ref), rtol=0, atol=0)
    assert out.shape == (B, Z + 2, IM, IM)

    # Extra check: multi-block grid + uneven batch (exercises padding path).
    B2 = 300
    z2 = jax.random.normal(jax.random.PRNGKey(1), (B2, Z), dtype=jnp.float32)
    out2 = jax.block_until_ready(spatial_broadcast_decoder(z2, im_size=IM, max_tb=128))
    ref2 = _reference(z2, im_size=IM)
    np.testing.assert_allclose(np.asarray(out2), np.asarray(ref2), rtol=0, atol=0)
    assert out2.shape == (B2, Z + 2, IM, IM)

    print("KERNEL_OK")
</pallas_src>

<mosaic_0001>
module attributes {stable_mosaic.version = 11 : i64} {
  func.func @_sbd_kernel(%arg0: i32, %arg1: memref<8x256xf32, #tpu.memory_space<vmem>>, %arg2: memref<2x8x1xf32, #tpu.memory_space<vmem>>, %arg3: memref<2x8x256xf32, #tpu.memory_space<vmem>>) attributes {dimension_semantics = [#tpu.dimension_semantics<parallel>], iteration_bounds = array<i64: 1>, scalar_prefetch = 0 : i64, scratch_operands = 0 : i64, tpu.core_type = #tpu.core_type<tc>, window_params = [{pipeline_mode = #tpu.pipeline_mode<synchronous>, transform_indices = @transform_0, window_bounds = array<i64: 8, 256>}, {transform_indices = @transform_1, window_bounds = array<i64: 2, 8, 1>}, {transform_indices = @transform_2, window_bounds = array<i64: 2, 8, 256>}]} {
    %0 = tpu.iota {dimensions = array<i32: 1>} : vector<2x8x256xi32>
    %c0 = arith.constant 0 : index
    %c0_0 = arith.constant 0 : index
    %1 = vector.load %arg1[%c0, %c0_0] : memref<8x256xf32, #tpu.memory_space<vmem>>, vector<8x256xf32>
    %2 = vector.shape_cast %1 : vector<8x256xf32> to vector<1x8x256xf32>
    %3 = vector.shape_cast %2 : vector<1x8x256xf32> to vector<1x8x256xf32>
    %4 = vector.broadcast %3 : vector<1x8x256xf32> to vector<2x8x256xf32>
    %c0_1 = arith.constant 0 : index
    %c0_2 = arith.constant 0 : index
    %c0_3 = arith.constant 0 : index
    %5 = vector.load %arg2[%c0_1, %c0_2, %c0_3] : memref<2x8x1xf32, #tpu.memory_space<vmem>>, vector<2x8x1xf32>
    %6 = vector.shape_cast %5 : vector<2x8x1xf32> to vector<2x8x1xf32>
    %7 = vector.broadcast %6 : vector<2x8x1xf32> to vector<2x8x256xf32>
    %c2_i32 = arith.constant 2 : i32
    %8 = vector.broadcast %c2_i32 : i32 to vector<2x8x256xi32>
    %9 = arith.cmpi slt, %0, %8 : vector<2x8x256xi32>
    %10 = arith.select %9, %4, %7 : vector<2x8x256xi1>, vector<2x8x256xf32>
    %c0_4 = arith.constant 0 : index
    %c0_5 = arith.constant 0 : index
    %c0_6 = arith.constant 0 : index
    %11 = vector.load %arg3[%c0_4, %c0_5, %c0_6] : memref<2x8x256xf32, #tpu.memory_space<vmem>>, vector<2x8x256xf32>
    tpu.vector_store %arg3[%c0_4, %c0_5, %c0_6], %10 {strides = array<i32>} : memref<2x8x256xf32, #tpu.memory_space<vmem>>, vector<2x8x256xf32>,
    return
  }
  func.func @transform_0(%arg0: i32) -> (i32, i32) {
    %c0_i32 = arith.constant 0 : i32
    %c0_i32_0 = arith.constant 0 : i32
    %c0_i32_1 = arith.constant 0 : i32
    return %c0_i32, %c0_i32_0 : i32, i32
  }
  func.func @transform_1(%arg0: i32) -> (i32, i32, i32) {
    %c0_i32 = arith.constant 0 : i32
    %c0_i32_0 = arith.constant 0 : i32
    %c0_i32_1 = arith.constant 0 : i32
    return %arg0, %c0_i32, %c0_i32_0 : i32, i32, i32
  }
  func.func @transform_2(%arg0: i32) -> (i32, i32, i32) {
    %c0_i32 = arith.constant 0 : i32
    %c0_i32_0 = arith.constant 0 : i32
    %c0_i32_1 = arith.constant 0 : i32
    return %arg0, %c0_i32, %c0_i32_0 : i32, i32, i32
  }
}

</mosaic_0001>

<llo_original>
// kernel: tpu_custom_call.1
$region0: #{tpu_custom_call.1}
  #allocation0 [shape = 'u32[]', space=smem, size = 0x4, offset = 0x4, fixed_abs, tag = 'smem constant byte address 0x4 - core index']
  #allocation1 [shape = 'u32[144,128]{1,0:T(1,128)}', space=vmem, size = 0x12000, scoped, tag = 'internal scratch']
  %s0 = inlined_call_operand.vmem [shape: f32[8,256], index: 0, kind: input, shape index: {}]
  %s1 = inlined_call_operand.vmem [shape: f32[2,8,1], index: 1, kind: input, shape index: {}]
  %s2 = inlined_call_operand.hbm [shape: f32[2,8,256], index: 2, kind: output, shape index: {}]
  %s3 = sld [smem:[#allocation0]]
  $region18: #{tpu_custom_call.1} parent=0
    _
  %s5 = ssub.s32 1, %s3
  %s6 = scalar_select 0, %s5, %s3
  $region1: #{tpu_custom_call.1} parent=0
    #allocation2 [shape = 'u8[16384]{0}', space=vmem, size = 0x4000, scoped, tag = 'output window, operand 0, single buffered']
    #allocation3 [shape = 's32[1]{0}', space=sflag, size = 0x4, scoped, tag = 'scoped memory for tpu_custom_call.1']
    %7 = vsyncpa [#allocation3], 0
    // Predicated region
    $region2: #{tpu_custom_call.1} parent=1 // pred_check
      _
    $region3: #{tpu_custom_call.1} parent=1 // pred_check_branch
      %9 = sbr.rel (0) target = $region5
    $region4: #{tpu_custom_call.1} parent=1 // pred_region
      _
    $region5: #{tpu_custom_call.1} parent=1 // pred_fallthru
      _
    // Predicated region
    $region6: #{tpu_custom_call.1} parent=1 // pred_check
      _
    $region7: #{tpu_custom_call.1} parent=1 // pred_check_branch
      %11 = sbr.rel (0) target = $region9
    $region8: #{tpu_custom_call.1} parent=1 // pred_region
      _
    $region9: #{tpu_custom_call.1} parent=1 // pred_fallthru
      _
    %v12 = vlaneseq
    %v13 = vshrl.u32 %v12, 7
    %v14 = vld [vmem:[%s0] sm:$0xff]
    %v15 = vld [vmem:[%s0 + $0x8] sm:$0xff]
    %v16 = vld [vmem:[%s1] sm:$0xff]
    %v17 = vld [vmem:[%s1 + $0x8] sm:$0xff]
    %19 = vset.pattern.permute.xlu0 0
    %20 = vperm.xlu0 %19, %v16
    %v21 = vpop.permute.xlu0 %20
    %24 = vset.pattern.permute.xlu0 0
    %25 = vperm.xlu0 %24, %v17
    %v26 = vpop.permute.xlu0 %25
    %vm28 = vcmp.lt.s32.totalorder %v13, 2
    %v29 = vsel %vm28, %v14, %v21
    %v30 = vsel %vm28, %v15, %v21
    %v31 = vsel %vm28, %v14, %v26
    %v32 = vsel %vm28, %v15, %v26
    %33 = vst [vmem:[#allocation2] sm:$0xff] %v29
    %34 = vst [vmem:[#allocation2 + $0x8] sm:$0xff] %v30
    %35 = vst [vmem:[#allocation2 + $0x10] sm:$0xff] %v31
    %36 = vst [vmem:[#allocation2 + $0x18] sm:$0xff] %v32
    // Predicated region
    $region10: #{tpu_custom_call.1} parent=1 // pred_check
      _
    $region11: #{tpu_custom_call.1} parent=1 // pred_check_branch
      %38 = sbr.rel (0) target = $region13
    $region12: #{tpu_custom_call.1} parent=1 // pred_region
      %s40 = ssub.s32 512, 512
      %41 = vsyncadd [#allocation3], %s40
      %s42 = sshll.u32 [#allocation2], 4
      %s43 = int_to_ptr.vmem [resolvable:$true] %s42
      %48 = dma.vmem_to_hbm [thread:$0]  %s43, 512, %s2, [#allocation3], 256, 256, 16
    $region13: #{tpu_custom_call.1} parent=1 // pred_fallthru
      _
    // Predicated region
    $region14: #{tpu_custom_call.1} parent=1 // pred_check
      _
    $region15: #{tpu_custom_call.1} parent=1 // pred_check_branch
      %50 = sbr.rel (0) target = $region17
    $region16: #{tpu_custom_call.1} parent=1 // pred_region
      %51 = dma.done [#allocation3], 512
    $region17: #{tpu_custom_call.1} parent=1 // pred_fallthru
      _
    %52 = vsyncpa [#allocation3], 1

</llo_original>
